<compile_context>
chip_gen: v5e
topology: v5e:2x2
jax: 0.10.0
libtpu: 0.0.40
codegen_flags: <defaults>
</compile_context>

<pallas_src>
import jax
import jax.numpy as jnp
from jax.experimental import pallas as pl
from jax.experimental.pallas import tpu as pltpu


def _round_up(x, m):
    return (x + m - 1) // m * m


def _epi_mse_kernel(slot_ref, pred_ref, tgt_ref, out_ref, acc_ref):
    # slot_ref: (1, 1, TL) int32  rank of each column among selected, -1 if dropped
    # pred_ref: (1, C, TL)        one L-chunk of pred for batch i
    # tgt_ref:  (1, C, T)         target for batch i (same block for every chunk)
    # out_ref:  (1, 8, 128) f32   per-batch partial sum (only [0,0,0] is nonzero)
    # acc_ref:  (C, T) f32        VMEM accumulator for the gathered prediction
    l = pl.program_id(1)
    n_l = pl.num_programs(1)
    T = tgt_ref.shape[-1]
    TL = slot_ref.shape[-1]

    @pl.when(l == 0)
    def _():
        acc_ref[...] = jnp.zeros_like(acc_ref)

    # One-hot selection matrix, (T, TL): onehot[t, l] = 1 iff column l is the
    # t-th lmask-selected column.  Built with a sublane-broadcast compare (VPU).
    slot = slot_ref[0]                                            # (1, TL) int32
    t_iota = jax.lax.broadcasted_iota(jnp.int32, (T, TL), 0)
    one_hot = (slot == t_iota).astype(pred_ref.dtype)             # (T, TL)

    # Gather-as-matmul on the MXU: (C, TL) x (T, TL)^T -> (C, T), f32 accumulate.
    # Padded columns have pred == 0 and slot == -1, so they contribute exact 0.
    acc_ref[...] += jax.lax.dot_general(
        pred_ref[0], one_hot,
        dimension_numbers=(((1,), (1,)), ((), ())),
        preferred_element_type=jnp.float32)

    @pl.when(l == n_l - 1)
    def _():
        d = acc_ref[...] - tgt_ref[0].astype(jnp.float32)         # (C, T)
        s = jnp.sum(d * d, keepdims=True)                         # (1, 1)
        r = jax.lax.broadcasted_iota(jnp.int32, (8, 128), 0)
        c = jax.lax.broadcasted_iota(jnp.int32, (8, 128), 1)
        out_ref[0] = jnp.where((r == 0) & (c == 0), s, 0.0)


def epi_mse_loss(pred, target, lmask, alpha=1.0):
    B, C, L = pred.shape
    T = target.shape[2]

    # --- glue: O(B*L) rank map (no argsort, no gather, no HBM copy of pred_sel).
    pos = lmask > 0
    rank = jnp.cumsum(pos.astype(jnp.int32), axis=1) - 1           # (B, L)
    slot = jnp.where(pos, rank, -1).astype(jnp.int32)              # -1 -> never selected

    # --- tiling along L.  Cap the pred block at ~2 MiB so double buffering stays
    # far below the scoped VMEM limit.  TODO(synk): also chunk C / T for very
    # large channel or target widths (not needed for typical module shapes).
    itemsize = jnp.dtype(pred.dtype).itemsize
    tl_cap = max(128, min(8192, (2 * 1024 * 1024 // max(C * itemsize, 1)) // 128 * 128))
    TL = min(_round_up(L, 128), tl_cap)
    L_pad = _round_up(L, TL)
    n_l = L_pad // TL

    if L_pad != L:
        # Pad columns: pred with 0.0 and slot with -1 so padding never selects.
        pred = jnp.pad(pred, ((0, 0), (0, 0), (0, L_pad - L)))
        slot = jnp.pad(slot, ((0, 0), (0, L_pad - L)), constant_values=-1)
    slot = slot.reshape(B, 1, L_pad)

    partials = pl.pallas_call(
        _epi_mse_kernel,
        out_shape=jax.ShapeDtypeStruct((B, 8, 128), jnp.float32),
        grid=(B, n_l),
        in_specs=[
            pl.BlockSpec((1, 1, TL), lambda i, l: (i, 0, l)),
            pl.BlockSpec((1, C, TL), lambda i, l: (i, 0, l)),
            pl.BlockSpec((1, C, T), lambda i, l: (i, 0, 0)),
        ],
        out_specs=pl.BlockSpec((1, 8, 128), lambda i, l: (i, 0, 0)),
        scratch_shapes=[pltpu.VMEM((C, T), jnp.float32)],
        compiler_params=pltpu.CompilerParams(
            dimension_semantics=("parallel", "arbitrary")),
    )(slot, pred, target)

    # Tiny final reduction (B*8*128 floats) in plain XLA.
    sum_loss = jnp.sum(partials)
    return alpha * sum_loss / (B * C)


def epi_mse_loss_ref(pred, target, lmask, alpha=1.0):
    # Independent reference (stable argsort selection) mirroring the PyTorch module.
    B, C, _ = pred.shape
    T = target.shape[2]
    order = jnp.argsort((lmask <= 0).astype(jnp.int32), axis=1, stable=True)
    idx = order[:, :T]
    pred_sel = jnp.take_along_axis(pred, idx[:, None, :], axis=2)
    return alpha * jnp.sum((pred_sel - target) ** 2) / (B * C)


if __name__ == "__main__":
    B, C, L, T = 2, 4, 16, 8
    alpha = 1.0

    key = jax.random.PRNGKey(0)
    k_pred, k_tgt, k_mask = jax.random.split(key, 3)

    pred = jax.random.normal(k_pred, (B, C, L), dtype=jnp.float32)
    target = jax.random.normal(k_tgt, (B, C, T), dtype=jnp.float32)

    # Build lmask with exactly T positive entries per batch row (so each
    # pred[i, :, lmask[i] > 0] has shape (C, T), matching target[i]).
    scores = jax.random.uniform(k_mask, (B, L), dtype=jnp.float32)
    thresh = jnp.sort(scores, axis=1)[:, L - T][:, None]
    lmask = (scores >= thresh).astype(jnp.float32)

    loss_fn = jax.jit(epi_mse_loss)
    loss = jax.block_until_ready(loss_fn(pred, target, lmask, alpha))
    loss_ref = jax.block_until_ready(epi_mse_loss_ref(pred, target, lmask, alpha))

    assert jnp.allclose(loss, loss_ref, rtol=1e-5, atol=1e-5), (loss, loss_ref)
    print("KERNEL_OK")
</pallas_src>

<mosaic_0001>
module attributes {stable_mosaic.version = 11 : i64} {
  func.func @_epi_mse_kernel(%arg0: i32, %arg1: i32, %arg2: memref<1x1x128xi32, #tpu.memory_space<vmem>>, %arg3: memref<1x4x128xf32, #tpu.memory_space<vmem>>, %arg4: memref<1x4x8xf32, #tpu.memory_space<vmem>>, %arg5: memref<1x8x128xf32, #tpu.memory_space<vmem>>, %arg6: memref<4x8xf32, #tpu.memory_space<vmem>>) attributes {dimension_semantics = [#tpu.dimension_semantics<parallel>, #tpu.dimension_semantics<arbitrary>], iteration_bounds = array<i64: 2, 1>, scalar_prefetch = 0 : i64, scratch_operands = 1 : i64, tpu.core_type = #tpu.core_type<tc>, window_params = [{transform_indices = @transform_0, window_bounds = array<i64: 1, 1, 128>}, {transform_indices = @transform_1, window_bounds = array<i64: 1, 4, 128>}, {transform_indices = @transform_2, window_bounds = array<i64: 1, 4, 8>}, {transform_indices = @transform_3, window_bounds = array<i64: 1, 8, 128>}]} {
    %c0_i32 = arith.constant 0 : i32
    %0 = arith.cmpi eq, %arg1, %c0_i32 : i32
    %1 = arith.extui %0 : i1 to i32
    %c0_i32_0 = arith.constant 0 : i32
    %2 = arith.cmpi ne, %1, %c0_i32_0 : i32
    scf.if %2 {
      %cst_12 = arith.constant 0.000000e+00 : f32
      %19 = vector.broadcast %cst_12 : f32 to vector<4x8xf32>
      %c0_13 = arith.constant 0 : index
      %c0_14 = arith.constant 0 : index
      %20 = vector.load %arg6[%c0_13, %c0_14] : memref<4x8xf32, #tpu.memory_space<vmem>>, vector<4x8xf32>
      tpu.vector_store %arg6[%c0_13, %c0_14], %19 {strides = array<i32>} : memref<4x8xf32, #tpu.memory_space<vmem>>, vector<4x8xf32>,
    } else {
    }
    %c0 = arith.constant 0 : index
    %c0_1 = arith.constant 0 : index
    %c0_2 = arith.constant 0 : index
    %3 = vector.load %arg2[%c0, %c0_1, %c0_2] : memref<1x1x128xi32, #tpu.memory_space<vmem>>, vector<1x1x128xi32>
    %4 = vector.shape_cast %3 : vector<1x1x128xi32> to vector<1x128xi32>
    %5 = tpu.iota {dimensions = array<i32: 0>} : vector<8x128xi32>
    %6 = vector.broadcast %4 : vector<1x128xi32> to vector<8x128xi32>
    %7 = arith.cmpi eq, %6, %5 : vector<8x128xi32>
    %8 = arith.extui %7 : vector<8x128xi1> to vector<8x128xi32>
    %9 = arith.sitofp %8 : vector<8x128xi32> to vector<8x128xf32>
    %c0_3 = arith.constant 0 : index
    %c0_4 = arith.constant 0 : index
    %10 = vector.load %arg6[%c0_3, %c0_4] : memref<4x8xf32, #tpu.memory_space<vmem>>, vector<4x8xf32>
    %c0_5 = arith.constant 0 : index
    %c0_6 = arith.constant 0 : index
    %c0_7 = arith.constant 0 : index
    %11 = vector.load %arg3[%c0_5, %c0_6, %c0_7] : memref<1x4x128xf32, #tpu.memory_space<vmem>>, vector<1x4x128xf32>
    %12 = vector.shape_cast %11 : vector<1x4x128xf32> to vector<4x128xf32>
    %cst = arith.constant dense<0.000000e+00> : vector<4x8xf32>
    %13 = tpu.matmul %12, %9, %cst {dimension_numbers = #tpu.dot_dimension_numbers<[1], [1], [0], [0], [0, 0, 1, 0], [], []>} : vector<4x128xf32>, vector<8x128xf32>, vector<4x8xf32> -> vector<4x8xf32>
    %14 = arith.addf %10, %13 : vector<4x8xf32>
    %c0_8 = arith.constant 0 : index
    %c0_9 = arith.constant 0 : index
    %15 = vector.load %arg6[%c0_8, %c0_9] : memref<4x8xf32, #tpu.memory_space<vmem>>, vector<4x8xf32>
    tpu.vector_store %arg6[%c0_8, %c0_9], %14 {strides = array<i32>} : memref<4x8xf32, #tpu.memory_space<vmem>>, vector<4x8xf32>,
    %c0_i32_10 = arith.constant 0 : i32
    %16 = arith.cmpi eq, %arg1, %c0_i32_10 : i32
    %17 = arith.extui %16 : i1 to i32
    %c0_i32_11 = arith.constant 0 : i32
    %18 = arith.cmpi ne, %17, %c0_i32_11 : i32
    scf.if %18 {
      %c0_12 = arith.constant 0 : index
      %c0_13 = arith.constant 0 : index
      %19 = vector.load %arg6[%c0_12, %c0_13] : memref<4x8xf32, #tpu.memory_space<vmem>>, vector<4x8xf32>
      %c0_14 = arith.constant 0 : index
      %c0_15 = arith.constant 0 : index
      %c0_16 = arith.constant 0 : index
      %20 = vector.load %arg4[%c0_14, %c0_15, %c0_16] : memref<1x4x8xf32, #tpu.memory_space<vmem>>, vector<1x4x8xf32>
      %21 = vector.shape_cast %20 : vector<1x4x8xf32> to vector<4x8xf32>
      %22 = arith.subf %19, %21 : vector<4x8xf32>
      %23 = arith.mulf %22, %22 : vector<4x8xf32>
      %24 = vector.shape_cast %23 : vector<4x8xf32> to vector<1x4x8xf32>
      %cst_17 = arith.constant dense<0.000000e+00> : vector<1xf32>
      %25 = vector.multi_reduction <add>, %24, %cst_17 [1, 2] : vector<1x4x8xf32> to vector<1xf32>
      %26 = vector.shape_cast %25 : vector<1xf32> to vector<1x1x1xf32>
      %27 = vector.extract %26[0, 0, 0] : f32 from vector<1x1x1xf32>
      %28 = vector.broadcast %27 : f32 to vector<1x1xf32>
      %29 = tpu.iota {dimensions = array<i32: 0>} : vector<8x128xi32>
      %30 = tpu.iota {dimensions = array<i32: 1>} : vector<8x128xi32>
      %c0_i32_18 = arith.constant 0 : i32
      %31 = vector.broadcast %c0_i32_18 : i32 to vector<8x128xi32>
      %32 = arith.cmpi eq, %29, %31 : vector<8x128xi32>
      %c0_i32_19 = arith.constant 0 : i32
      %33 = vector.broadcast %c0_i32_19 : i32 to vector<8x128xi32>
      %34 = arith.cmpi eq, %30, %33 : vector<8x128xi32>
      %35 = arith.andi %32, %34 : vector<8x128xi1>
      %cst_20 = arith.constant 0.000000e+00 : f32
      %36 = vector.shape_cast %28 : vector<1x1xf32> to vector<1x1xf32>
      %37 = vector.broadcast %36 : vector<1x1xf32> to vector<8x128xf32>
      %38 = vector.broadcast %cst_20 : f32 to vector<8x128xf32>
      %39 = arith.select %35, %37, %38 : vector<8x128xi1>, vector<8x128xf32>
      %c0_21 = arith.constant 0 : index
      %c0_22 = arith.constant 0 : index
      %c0_23 = arith.constant 0 : index
      %40 = vector.load %arg5[%c0_21, %c0_22, %c0_23] : memref<1x8x128xf32, #tpu.memory_space<vmem>>, vector<1x8x128xf32>
      %41 = vector.shape_cast %40 : vector<1x8x128xf32> to vector<8x128xf32>
      %42 = vector.shape_cast %39 : vector<8x128xf32> to vector<1x8x128xf32>
      tpu.vector_store %arg5[%c0_21, %c0_22, %c0_23], %42 {strides = array<i32>} : memref<1x8x128xf32, #tpu.memory_space<vmem>>, vector<1x8x128xf32>,
    } else {
    }
    return
  }
  func.func @transform_0(%arg0: i32, %arg1: i32) -> (i32, i32, i32) {
    %c0_i32 = arith.constant 0 : i32
    %c0_i32_0 = arith.constant 0 : i32
    return %arg0, %c0_i32, %arg1 : i32, i32, i32
  }
  func.func @transform_1(%arg0: i32, %arg1: i32) -> (i32, i32, i32) {
    %c0_i32 = arith.constant 0 : i32
    %c0_i32_0 = arith.constant 0 : i32
    return %arg0, %c0_i32, %arg1 : i32, i32, i32
  }
  func.func @transform_2(%arg0: i32, %arg1: i32) -> (i32, i32, i32) {
    %c0_i32 = arith.constant 0 : i32
    %c0_i32_0 = arith.constant 0 : i32
    %c0_i32_1 = arith.constant 0 : i32
    return %arg0, %c0_i32, %c0_i32_0 : i32, i32, i32
  }
  func.func @transform_3(%arg0: i32, %arg1: i32) -> (i32, i32, i32) {
    %c0_i32 = arith.constant 0 : i32
    %c0_i32_0 = arith.constant 0 : i32
    %c0_i32_1 = arith.constant 0 : i32
    return %arg0, %c0_i32, %c0_i32_0 : i32, i32, i32
  }
}

</mosaic_0001>

<llo_original>
// kernel: epi_mse_loss.1
$region0: #{epi_mse_loss.1}
  #allocation0 [shape = 'u32[]', space=smem, size = 0x4, offset = 0x4, fixed_abs, tag = 'smem constant byte address 0x4 - core index']
  #allocation1 [shape = 'u32[72,128]{1,0:T(1,128)}', space=vmem, size = 0x9000, scoped, tag = 'internal scratch']
  #allocation2 [shape = 'f32[4,8]{1,0:T(4,128)}', space=vmem, size = 0x800, scoped, tag = 'scratch operand']
  %s0 = inlined_call_operand.vmem [shape: s32[2,1,128], index: 0, kind: input, shape index: {}]
  %s1 = inlined_call_operand.vmem [shape: f32[2,4,128], index: 1, kind: input, shape index: {}]
  %s2 = inlined_call_operand.vmem [shape: f32[2,4,8], index: 2, kind: input, shape index: {}]
  %s3 = inlined_call_operand.vmem [shape: f32[2,8,128], index: 3, kind: output, shape index: {}]
  %s4 = sld [smem:[#allocation0]]
  $region53: #{epi_mse_loss.1} parent=0
    _
  %s6 = ssub.s32 1, %s4
  %s7 = scalar_select 0, %s6, %s4
  loop: start=0, step=1, limit=4
  $region2: #{epi_mse_loss.1} parent=0 // loop_pre_header
    _
  $region3: #{epi_mse_loss.1} parent=0 // loop_header
    %s9 = sphi 0, %s13
    %p10 = scmp.ge.s32.totalorder %s9, 4
    %s16 = sphi 0, %s28
    %s17 = sphi 0, %s24
    %s18 = sphi 0, %s16
    %s19 = sphi 0, %s17
    %s20 = sphi 0, %s18
    %s21 = sphi 0, %s19
    %s33 = sphi 0, %s35
    %s36 = sphi 0, %s33
    %s37 = sphi 0, %s36
    %s53 = sphi 0, %s37
    %s61 = sphi 0, %s63
    %s64 = sphi 0, %s61
    %s65 = sphi 0, %s64
    %s81 = sphi 0, %s65
    %s87 = sphi 0, %s89
    %s90 = sphi 0, %s87
    %s91 = sphi 0, %s90
    %s107 = sphi 0, %s91
    %s113 = sphi 0, %s115
    %s116 = sphi 0, %s113
    %s117 = sphi 0, %s116
    %s133 = sphi 0, %s117
  $region4: #{epi_mse_loss.1} parent=0 // loop_header_branch
    %12 = sbr.rel (%p10) target = $region8
  $region5: #{epi_mse_loss.1} parent=0 // loop_body
    %s14 = ssub.s32 %s9, 1
    %s15 = ssub.s32 %s9, 2
    %s22 = sadd.s32 1, %s17
    %p23 = scmp.ge.s32.totalorder %s22, 1
    %s24 = scalar_select %p23, 0, %s22
    %s25 = sadd.s32 1, %s16
    %s26 = scalar_select %p23, %s25, %s16
    %p27 = scmp.ge.s32.totalorder %s26, 2
    %s28 = scalar_select %p27, 0, %s26
    %s29 = ssub.s32 %s16, %s28
    %s30 = ssub.s32 %s17, %s24
    %s31 = sor.u32 %s29, %s30
    %p32 = scmp.eq.s32.totalorder %s31, 0
    %s34 = sadd.s32 %s33, 1
    %s35 = scalar_select %p32, %s33, %s34
    %p38 = pneg %p32
    %p39 = scmp.eq.s32.totalorder %s9, 1
    %p40 = por %p38, %p39
    %p41 = scmp.ne.s32.totalorder %s33, %s36
    %p42 = scmp.eq.s32.totalorder %s9, 0
    %p43 = por %p41, %p42
    %p44 = scmp.ne.s32.totalorder %s33, %s36
    %p45 = scmp.eq.s32.totalorder %s14, 1
    %p46 = por %p44, %p45
    %p47 = scmp.ne.s32.totalorder %s36, %s37
    %p48 = scmp.eq.s32.totalorder %s14, 0
    %p49 = por %p47, %p48
    %p50 = scmp.ne.s32.totalorder %s36, %s37
    %p51 = scmp.eq.s32.totalorder %s15, 1
    %p52 = por %p50, %p51
    %p54 = scmp.ne.s32.totalorder %s37, %s53
    %p55 = scmp.eq.s32.totalorder %s15, 0
    %p56 = por %p54, %p55
    %s57 = ssub.s32 %s16, %s28
    %s58 = ssub.s32 %s17, %s24
    %s59 = sor.u32 %s57, %s58
    %p60 = scmp.eq.s32.totalorder %s59, 0
    %s62 = sadd.s32 %s61, 1
    %s63 = scalar_select %p60, %s61, %s62
    %p66 = pneg %p60
    %p67 = scmp.eq.s32.totalorder %s9, 1
    %p68 = por %p66, %p67
    %p69 = scmp.ne.s32.totalorder %s61, %s64
    %p70 = scmp.eq.s32.totalorder %s9, 0
    %p71 = por %p69, %p70
    %p72 = scmp.ne.s32.totalorder %s61, %s64
    %p73 = scmp.eq.s32.totalorder %s14, 1
    %p74 = por %p72, %p73
    %p75 = scmp.ne.s32.totalorder %s64, %s65
    %p76 = scmp.eq.s32.totalorder %s14, 0
    %p77 = por %p75, %p76
    %p78 = scmp.ne.s32.totalorder %s64, %s65
    %p79 = scmp.eq.s32.totalorder %s15, 1
    %p80 = por %p78, %p79
    %p82 = scmp.ne.s32.totalorder %s65, %s81
    %p83 = scmp.eq.s32.totalorder %s15, 0
    %p84 = por %p82, %p83
    %s85 = ssub.s32 %s16, %s28
    %p86 = scmp.eq.s32.totalorder %s85, 0
    %s88 = sadd.s32 %s87, 1
    %s89 = scalar_select %p86, %s87, %s88
    %p92 = pneg %p86
    %p93 = scmp.eq.s32.totalorder %s9, 1
    %p94 = por %p92, %p93
    %p95 = scmp.ne.s32.totalorder %s87, %s90
    %p96 = scmp.eq.s32.totalorder %s9, 0
    %p97 = por %p95, %p96
    %p98 = scmp.ne.s32.totalorder %s87, %s90
    %p99 = scmp.eq.s32.totalorder %s14, 1
    %p100 = por %p98, %p99
    %p101 = scmp.ne.s32.totalorder %s90, %s91
    %p102 = scmp.eq.s32.totalorder %s14, 0
    %p103 = por %p101, %p102
    %p104 = scmp.ne.s32.totalorder %s90, %s91
    %p105 = scmp.eq.s32.totalorder %s15, 1
    %p106 = por %p104, %p105
    %p108 = scmp.ne.s32.totalorder %s91, %s107
    %p109 = scmp.eq.s32.totalorder %s15, 0
    %p110 = por %p108, %p109
    %s111 = ssub.s32 %s16, %s28
    %p112 = scmp.eq.s32.totalorder %s111, 0
    %s114 = sadd.s32 %s113, 1
    %s115 = scalar_select %p112, %s113, %s114
    %p118 = pneg %p112
    %p119 = scmp.eq.s32.totalorder %s9, 1
    %p120 = por %p118, %p119
    %p121 = scmp.ne.s32.totalorder %s113, %s116
    %p122 = scmp.eq.s32.totalorder %s9, 0
    %p123 = por %p121, %p122
    %p124 = scmp.ne.s32.totalorder %s113, %s116
    %p125 = scmp.eq.s32.totalorder %s14, 1
    %p126 = por %p124, %p125
    %p127 = scmp.ne.s32.totalorder %s116, %s117
    %p128 = scmp.eq.s32.totalorder %s14, 0
    %p129 = por %p127, %p128
    %p130 = scmp.ne.s32.totalorder %s116, %s117
    %p131 = scmp.eq.s32.totalorder %s15, 1
    %p132 = por %p130, %p131
    %p134 = scmp.ne.s32.totalorder %s117, %s133
    %p135 = scmp.eq.s32.totalorder %s15, 0
    %p136 = por %p134, %p135
    %p137 = scmp.le.s32.totalorder 1, %s9
    %p138 = scmp.lt.s32.totalorder %s9, 3
    %p139 = pnand %p137, %p138
    %p140 = pneg %p139
    // Predicated region
    $region9: #{epi_mse_loss.1} parent=5 // pred_check
      _
    $region10: #{epi_mse_loss.1} parent=5 // pred_check_branch
      %142 = sbr.rel (%p139) target = $region12
    $region11: #{epi_mse_loss.1} parent=5 // pred_region
      %s143 = ssub.s32 %s9, 1
    $region12: #{epi_mse_loss.1} parent=5 // pred_fallthru
      _
    %p144 = scmp.lt.s32.totalorder %s9, 2
    // Predicated region
    $region13: #{epi_mse_loss.1} parent=5 // pred_check
      %p145 = pneg %p144
    $region14: #{epi_mse_loss.1} parent=5 // pred_check_branch
      %147 = sbr.rel (%p145) target = $region16
    $region15: #{epi_mse_loss.1} parent=5 // pred_region
      // Predicated region
      $region17: #{epi_mse_loss.1} parent=15 // pred_check
        %p148 = pneg %p43
      $region18: #{epi_mse_loss.1} parent=15 // pred_check_branch
        %150 = sbr.rel (%p148) target = $region20
      $region19: #{epi_mse_loss.1} parent=15 // pred_region
        %p151 = scmp.lt.s32.totalorder %s16, 1
        %s152 = scalar_select %p151, %s16, 1
        %p153 = scmp.lt.s32.totalorder %s17, 0
        %s154 = scalar_select %p153, %s17, 0
        %s155 = sadd.s32 %s154, %s152
        %s156 = scalar_lea.vmem %s0, %s155
      $region20: #{epi_mse_loss.1} parent=15 // pred_fallthru
        _
      // Predicated region
      $region21: #{epi_mse_loss.1} parent=15 // pred_check
        %p157 = pneg %p71
      $region22: #{epi_mse_loss.1} parent=15 // pred_check_branch
        %159 = sbr.rel (%p157) target = $region24
      $region23: #{epi_mse_loss.1} parent=15 // pred_region
        %p160 = scmp.lt.s32.totalorder %s16, 1
        %s161 = scalar_select %p160, %s16, 1
        %p162 = scmp.lt.s32.totalorder %s17, 0
        %s163 = scalar_select %p162, %s17, 0
        %s164 = sadd.s32 %s163, %s161
        %s165 = smul.addr %s164, 4
        %s166 = scalar_lea.vmem %s1, %s165
      $region24: #{epi_mse_loss.1} parent=15 // pred_fallthru
        _
      // Predicated region
      $region25: #{epi_mse_loss.1} parent=15 // pred_check
        %p167 = pneg %p97
      $region26: #{epi_mse_loss.1} parent=15 // pred_check_branch
        %169 = sbr.rel (%p167) target = $region28
      $region27: #{epi_mse_loss.1} parent=15 // pred_region
        %p170 = scmp.lt.s32.totalorder %s16, 1
        %s171 = scalar_select %p170, %s16, 1
        %s172 = smul.addr %s171, 4
        %s173 = scalar_lea.vmem %s2, %s172
      $region28: #{epi_mse_loss.1} parent=15 // pred_fallthru
        _
    $region16: #{epi_mse_loss.1} parent=5 // pred_fallthru
      _
    %p174 = scmp.le.s32.totalorder 1, %s9
    %p175 = scmp.lt.s32.totalorder %s9, 3
    %p176 = pnand %p174, %p175
    %p177 = pneg %p176
    // Predicated region
    $region29: #{epi_mse_loss.1} parent=5 // pred_check
      _
    $region30: #{epi_mse_loss.1} parent=5 // pred_check_branch
      %179 = sbr.rel (%p176) target = $region32
    $region31: #{epi_mse_loss.1} parent=5 // pred_region
      %s180 = ssub.s32 %s9, 1
      %p181 = scmp.lt.s32.totalorder %s18, 1
      %s182 = scalar_select %p181, %s18, 1
      %p183 = scmp.lt.s32.totalorder %s19, 0
      %s184 = scalar_select %p183, %s19, 0
      %s185 = sadd.s32 %s184, %s182
      %s186 = scalar_lea.vmem %s0, %s185
      %p187 = pneg %p49
      %p188 = pneg %p46
      %p189 = scmp.lt.s32.totalorder %s18, 1
      %s190 = scalar_select %p189, %s18, 1
      %p191 = scmp.lt.s32.totalorder %s19, 0
      %s192 = scalar_select %p191, %s19, 0
      %s193 = sadd.s32 %s192, %s190
      %s194 = smul.addr %s193, 4
      %s195 = scalar_lea.vmem %s1, %s194
      %p196 = pneg %p77
      %p197 = pneg %p74
      %p198 = scmp.lt.s32.totalorder %s18, 1
      %s199 = scalar_select %p198, %s18, 1
      %s200 = smul.addr %s199, 4
      %s201 = scalar_lea.vmem %s2, %s200
      %p202 = pneg %p103
      %p203 = pneg %p100
      %p204 = pneg %p129
      %p205 = pneg %p126
      %p206 = scmp.lt.s32.totalorder %s18, 1
      %s207 = scalar_select %p206, %s18, 1
      %s208 = smul.addr %s207, 8
      %s209 = scalar_lea.vmem %s3, %s208
      %p210 = scmp.lt.s32.totalorder %s18, 1
      %s211 = scalar_select %p210, %s18, 1
      %p212 = scmp.lt.s32.totalorder %s19, 0
      %s213 = scalar_select %p212, %s19, 0
      %s214 = sadd.s32 %s213, %s211
      %s215 = scalar_lea.vmem %s0, %s214
      %p216 = scmp.lt.s32.totalorder %s18, 1
      %s217 = scalar_select %p216, %s18, 1
      %p218 = scmp.lt.s32.totalorder %s19, 0
      %s219 = scalar_select %p218, %s19, 0
      %s220 = sadd.s32 %s219, %s217
      %s221 = smul.addr %s220, 4
      %s222 = scalar_lea.vmem %s1, %s221
      %p223 = scmp.lt.s32.totalorder %s18, 1
      %s224 = scalar_select %p223, %s18, 1
      %s225 = smul.addr %s224, 4
      %s226 = scalar_lea.vmem %s2, %s225
      %p227 = scmp.lt.s32.totalorder %s18, 1
      %s228 = scalar_select %p227, %s18, 1
      %s229 = smul.addr %s228, 8
      %s230 = scalar_lea.vmem %s3, %s229
      %p231 = scmp.eq.s32.totalorder %s19, 0
      // Predicated region
      $region33: #{epi_mse_loss.1} parent=31 // pred_check
        %p232 = pneg %p231
      $region34: #{epi_mse_loss.1} parent=31 // pred_check_branch
        %234 = sbr.rel (%p232) target = $region36
      $region35: #{epi_mse_loss.1} parent=31 // pred_region
        %vm235 = vcmask 60416
        %236 = vst.msk [vmem:[#allocation2] sm:$0xf] %vm235, 0.0
      $region36: #{epi_mse_loss.1} parent=31 // pred_fallthru
        _
      %v237 = vld [vmem:[%s215] sm:$0x1]
      %v238 = vlaneseq
      %v239 = vshrl.u32 %v238, 7
      %v240 = vperm.slane %v237, 0
      %vm241 = vcmp.eq.s32.totalorder %v240, %v239
      %v242 = vsel %vm241, 1, 0
      %v243 = vcvt.s32.f32 %v242
      %v244 = vld [vmem:[#allocation2] sm:$0xf]
      %v245 = vld [vmem:[%s222] sm:$0xf]
      %246 = vmatpush.xpose.msra.mxu0 0.0
      %247 = vmatpush.xpose.msra.mxu0 0.0
      %248 = vmatpush.xpose.msra.mxu0 0.0
      %249 = vmatpush.xpose.msra.mxu0 0.0
      %250 = vmatpush.xpose.msra.mxu0 0.0
      %251 = vmatpush.xpose.msra.mxu0 0.0
      %252 = vmatpush.xpose.msra.mxu0 0.0
      %253 = vmatpush.xpose.msra.mxu0 0.0
      %254 = vmatpush.xpose.msra.mxu0 0.0
      %255 = vmatpush.xpose.msra.mxu0 0.0
      %256 = vmatpush.xpose.msra.mxu0 0.0
      %257 = vmatpush.xpose.msra.mxu0 0.0
      %258 = vmatpush.xpose.msra.mxu0 0.0
      %259 = vmatpush.xpose.msra.mxu0 0.0
      %260 = vmatpush.xpose.msra.mxu0 0.0
      %261 = vmatpush.xpose.msra.mxu0 %v243
      %262 = vmatmul.f32.gmra.mxu0 %v245
      %v263 = vpop.f32.mrf.mxu0
      %v264 = vadd.f32 0.0, %v263
      %265 = vdwg.mxu0
      %v266 = vadd.f32 %v244, %v264
      %vm267 = vcmask 60416
      %268 = vst.msk [vmem:[#allocation2] sm:$0xf] %vm267, %v266
      // Predicated region
      $region37: #{epi_mse_loss.1} parent=31 // pred_check
        %p269 = pneg %p231
      $region38: #{epi_mse_loss.1} parent=31 // pred_check_branch
        %271 = sbr.rel (%p269) target = $region40
      $region39: #{epi_mse_loss.1} parent=31 // pred_region
        %v272 = vld [vmem:[#allocation2] sm:$0xf]
        %v273 = vld [vmem:[%s226] sm:$0xf]
        %v274 = vsub.f32 %v272, %v273
        %v275 = vmul.f32 %v274, %v274
        %v276 = vsel %vm267, %v275, 0.0
        %277 = vadd.xlane.f32.xlu0 %v276
        %v278 = vpop.xlane.xlu0 %277
        %v279 = vrot.slane %v278, 4
        %v280 = vadd.f32 %v278, %v279
        %v281 = vrot.slane %v280, 2
        %v282 = vadd.f32 %v280, %v281
        %v283 = vrot.slane %v282, 1
        %v284 = vadd.f32 %v282, %v283
        %s285 = vtos %v284
        %v286 = vlaneseq
        %v287 = vand.u32 %v286, 127
        %vm288 = vcmp.eq.s32.totalorder %v239, 0
        %vm289 = vcmp.eq.s32.totalorder %v287, 0
        %vm290 = vmand %vm288, %vm289
        %v291 = vstv %s285
        %v292 = vsel %vm290, %v291, 0.0
        %293 = vst [vmem:[%s230] sm:$0xff] %v292
      $region40: #{epi_mse_loss.1} parent=31 // pred_fallthru
        _
      %p294 = scmp.lt.s32.totalorder %s18, 1
      %s295 = scalar_select %p294, %s18, 1
      %s296 = smul.addr %s295, 8
      %s297 = scalar_lea.vmem %s3, %s296
      // Predicated region
      $region41: #{epi_mse_loss.1} parent=31 // pred_check
        %p298 = pneg %p126
      $region42: #{epi_mse_loss.1} parent=31 // pred_check_branch
        %300 = sbr.rel (%p298) target = $region44
      $region43: #{epi_mse_loss.1} parent=31 // pred_region
        _
      $region44: #{epi_mse_loss.1} parent=31 // pred_fallthru
        _
    $region32: #{epi_mse_loss.1} parent=5 // pred_fallthru
      _
    %p301 = scmp.le.s32.totalorder 2, %s9
    // Predicated region
    $region45: #{epi_mse_loss.1} parent=5 // pred_check
      %p302 = pneg %p301
    $region46: #{epi_mse_loss.1} parent=5 // pred_check_branch
      %304 = sbr.rel (%p302) target = $region48
    $region47: #{epi_mse_loss.1} parent=5 // pred_region
      %s305 = ssub.s32 %s9, 2
      // Predicated region
      $region49: #{epi_mse_loss.1} parent=47 // pred_check
        %p306 = pneg %p132
      $region50: #{epi_mse_loss.1} parent=47 // pred_check_branch
        %308 = sbr.rel (%p306) target = $region52
      $region51: #{epi_mse_loss.1} parent=47 // pred_region
        %p309 = scmp.lt.s32.totalorder %s20, 1
        %s310 = scalar_select %p309, %s20, 1
        %s311 = smul.addr %s310, 8
        %s312 = scalar_lea.vmem %s3, %s311
      $region52: #{epi_mse_loss.1} parent=47 // pred_fallthru
        _
    $region48: #{epi_mse_loss.1} parent=5 // pred_fallthru
      _
  $region6: #{epi_mse_loss.1} parent=0 // loop_footer
    %s13 = sadd.s32 1, %s9
  $region7: #{epi_mse_loss.1} parent=0 // loop_footer_branch
    %8 = sbr.rel target = $region3
  $region8: #{epi_mse_loss.1} parent=0 // loop_exit
    _

</llo_original>
